<compile_context>
chip_gen: v6e
topology: v6e:2x2x1
jax: 0.10.0
libtpu: 0.0.40
codegen_flags: <defaults>
</compile_context>

<pallas_src>
import jax
import jax.numpy as jnp
from jax.experimental import pallas as pl
from jax.experimental.pallas import tpu as pltpu


# ----------------------------------------------------------------------------
# Tiled f32 matmul (init-time weight fold + generic V / Vt fallback path).
# ----------------------------------------------------------------------------
def _matmul_kernel(a_ref, b_ref, o_ref, acc_ref):
    @pl.when(pl.program_id(2) == 0)
    def _init():
        acc_ref[...] = jnp.zeros_like(acc_ref)

    acc_ref[...] += jnp.dot(
        a_ref[...], b_ref[...], preferred_element_type=jnp.float32
    )

    @pl.when(pl.program_id(2) == pl.num_programs(2) - 1)
    def _done():
        o_ref[...] = acc_ref[...].astype(o_ref.dtype)


def _pick_tile(dim, pref):
    if dim <= pref:
        return dim
    t = pref
    while t >= 8:
        if dim % t == 0:
            return t
        t //= 2
    return dim  # TODO(synk): pad ragged (non power-of-two) dims instead of full extent.


@jax.jit
def pallas_matmul(a, b):
    M, K = a.shape
    K2, N = b.shape
    assert K == K2
    tm, tn, tk = _pick_tile(M, 256), _pick_tile(N, 256), _pick_tile(K, 512)
    return pl.pallas_call(
        _matmul_kernel,
        out_shape=jax.ShapeDtypeStruct((M, N), jnp.float32),
        grid=(M // tm, N // tn, K // tk),
        in_specs=[
            pl.BlockSpec((tm, tk), lambda i, j, k: (i, k)),
            pl.BlockSpec((tk, tn), lambda i, j, k: (k, j)),
        ],
        out_specs=pl.BlockSpec((tm, tn), lambda i, j, k: (i, j)),
        scratch_shapes=[pltpu.VMEM((tm, tn), jnp.float32)],
        compiler_params=pltpu.CompilerParams(
            dimension_semantics=("parallel", "parallel", "arbitrary")
        ),
    )(a, b)


# ----------------------------------------------------------------------------
# Fused MLP kernel:  out = tanh(x @ W1 + t[row] * b1) @ W2   (one pallas_call)
#   x / W1 / W2 feed the MXU in bf16, f32 accumulation; bias + tanh in f32.
#   t is a per-row (rows, 1) f32 column so many timesteps batch into one call.
# ----------------------------------------------------------------------------
def _fused_mlp_kernel(x_ref, t_ref, w1_ref, b1_ref, w2_ref, o_ref):
    x16 = x_ref[...].astype(jnp.bfloat16)
    h = jnp.dot(x16, w1_ref[...], preferred_element_type=jnp.float32)
    h = jnp.tanh(h + t_ref[...] * b1_ref[...])          # f32 VPU + EUP (v5e-safe)
    o_ref[...] = jnp.dot(
        h.astype(jnp.bfloat16), w2_ref[...], preferred_element_type=jnp.float32
    ).astype(o_ref.dtype)


_BATCH_TILE = 256  # batch tile for the large-B megacore path


def _fused_mlp_call(x2d, t_col, w1, b1_row, w2):
    rows, D = x2d.shape
    Dw, Hd = w1.shape
    assert D == Dw and w2.shape == (Hd, D) and b1_row.shape == (1, Hd)
    assert t_col.shape == (rows, 1)

    if rows >= 2 * _BATCH_TILE and rows % _BATCH_TILE == 0:
        # Compute-relevant batch: tile the row axis and let both TensorCores
        # (v7x) split it; weights stay VMEM-resident across the whole batch.
        tb = _BATCH_TILE
        return pl.pallas_call(
            _fused_mlp_kernel,
            out_shape=jax.ShapeDtypeStruct((rows, D), jnp.float32),
            grid=(rows // tb,),
            in_specs=[
                pl.BlockSpec((tb, 1 * D), lambda i: (i, 0)),
                pl.BlockSpec((tb, 1), lambda i: (i, 0)),
                pl.BlockSpec((D, Hd), lambda i: (0, 0)),
                pl.BlockSpec((1, Hd), lambda i: (0, 0)),
                pl.BlockSpec((Hd, D), lambda i: (0, 0)),
            ],
            out_specs=pl.BlockSpec((tb, D), lambda i: (i, 0)),
            compiler_params=pltpu.CompilerParams(
                dimension_semantics=("parallel",)
            ),
        )(x2d, t_col, w1, b1_row, w2)

    # Overhead-bound small batch: single invocation, whole-array blocks,
    # no grid / pipeline / double buffering, no pad, no post-slice.
    return pl.pallas_call(
        _fused_mlp_kernel,
        out_shape=jax.ShapeDtypeStruct((rows, D), jnp.float32),
        in_specs=[pl.BlockSpec(memory_space=pltpu.MemorySpace.VMEM) for _ in range(5)],
        out_specs=pl.BlockSpec(memory_space=pltpu.MemorySpace.VMEM),
    )(x2d, t_col, w1, b1_row, w2)


@jax.jit
def fused_mlp_scalar_t(x2d, t, w1, b1_row, w2):
    """One timestep for the whole batch; t handled fully inside the jit."""
    t_col = jnp.full((x2d.shape[0], 1), jnp.asarray(t, jnp.float32),
                     dtype=jnp.float32)
    return _fused_mlp_call(x2d, t_col, w1, b1_row, w2)


@jax.jit
def fused_mlp_stacked(xs, ts, w1, b1_row, w2):
    """N timesteps x B samples in ONE kernel launch (amortizes weights/launch)."""
    N, B, D = xs.shape
    t_col = jnp.repeat(ts.astype(jnp.float32), B).reshape(N * B, 1)
    out = _fused_mlp_call(xs.reshape(N * B, D), t_col, w1, b1_row, w2)
    return out.reshape(N, B, D)


# ----------------------------------------------------------------------------
# SVD operator H_func (V / Vt), synthetic epsilon net, EpsilonNet(SVD).
# ----------------------------------------------------------------------------
class HFuncSVD:
    """SVD-style operator: V(x) = x @ V^T, Vt(x) = flatten(x) @ V."""

    def __init__(self, V_mat):
        self.V_mat = V_mat            # (D, D) orthogonal
        self.Vt_mat = V_mat.T

    def V(self, x):                   # (B, D) -> (B, D)
        return pallas_matmul(x, self.Vt_mat)

    def Vt(self, x):                  # (B, ...) -> (B, D)
        return pallas_matmul(x.reshape(x.shape[0], -1), self.V_mat)


class SyntheticEpsNet:
    """Deterministic synthetic epsilon network: tanh(x @ W1 + t * b1) @ W2."""

    def __init__(self, W1, b1, W2):
        self.W1 = W1                                  # (D, HIDDEN) f32
        self.W2 = W2                                  # (HIDDEN, D) f32
        self.b1_row = b1.reshape(1, -1).astype(jnp.float32)
        self._w1_bf16 = W1.astype(jnp.bfloat16)
        self._w2_bf16 = W2.astype(jnp.bfloat16)

    def __call__(self, x, t):
        B = x.shape[0]
        out = fused_mlp_scalar_t(x.reshape(B, -1), t,
                                 self._w1_bf16, self.b1_row, self._w2_bf16)
        return out.reshape(x.shape)


class EpsilonNet:
    def __init__(self, net, alphas_cumprod, timesteps):
        self.net = net
        self.alphas_cumprod = alphas_cumprod
        self.timesteps = timesteps

    def forward(self, x, t):
        return self.net(x, t)

    def predict_x0(self, x, t):
        acp = self.alphas_cumprod
        acp_t = acp[jnp.asarray(t, jnp.int32)] / acp[self.timesteps[0]]
        return (x - (1 - acp_t) ** 0.5 * self.forward(x, t)) / acp_t ** 0.5

    def score(self, x, t):
        acp = self.alphas_cumprod
        acp_t = acp[jnp.asarray(t, jnp.int32)] / acp[self.timesteps[0]]
        return -self.forward(x, t) / (1 - acp_t) ** 0.5


class EpsilonNetSVD(EpsilonNet):
    def __init__(self, net, alphas_cumprod, timesteps, H_func, shape):
        super().__init__(net, alphas_cumprod, timesteps)
        self.H_func = H_func
        self.shape = shape
        # Fold the orthogonal transform into the static net weights once:
        #   forward(x, t) == tanh(x @ (V^T W1) + t*b1) @ (W2 V)
        # Exact: the NCHW reshape between V() and the net is a row-major identity.
        if isinstance(net, SyntheticEpsNet):
            w1f = pallas_matmul(H_func.Vt_mat, net.W1)     # (D, HIDDEN) f32
            w2f = pallas_matmul(net.W2, H_func.V_mat)      # (HIDDEN, D) f32
            self._w1f = w1f.astype(jnp.bfloat16)           # bf16 MXU operands
            self._w2f = w2f.astype(jnp.bfloat16)
            self._b1_row = net.b1_row                      # f32 (1, HIDDEN)
        else:
            # TODO(synk): generic nets fall back to V -> net -> Vt (3 launches).
            self._w1f = None

    def forward(self, x, t):
        if self._w1f is not None:
            return fused_mlp_scalar_t(x, t, self._w1f, self._b1_row, self._w2f)
        x_img = self.H_func.V(x).reshape(self.shape)
        return self.H_func.Vt(self.net(x_img, t))

    def forward_batched(self, xs, ts):
        """Evaluate N (x, t) pairs in one fused kernel launch.

        xs: (N, B, D) stacked spectral-domain inputs, ts: (N,) timesteps.
        """
        assert self._w1f is not None
        return fused_mlp_stacked(xs, ts, self._w1f, self._b1_row, self._w2f)


# ----------------------------------------------------------------------------
# Main
# ----------------------------------------------------------------------------
if __name__ == "__main__":
    key = jax.random.PRNGKey(0)
    B, C, H, W = 2, 4, 8, 8
    D = C * H * W                     # 256
    HIDDEN = 128
    shape = (B, C, H, W)

    k_v, k_x, k_w1, k_b1, k_w2, k_xs = jax.random.split(key, 6)

    # Orthogonal V from QR of a random matrix (deterministic).
    V_mat, _ = jnp.linalg.qr(jax.random.normal(k_v, (D, D), dtype=jnp.float32))
    V_mat = V_mat.astype(jnp.float32)

    # Synthetic net parameters.
    W1 = 0.05 * jax.random.normal(k_w1, (D, HIDDEN), dtype=jnp.float32)
    b1 = 0.01 * jax.random.normal(k_b1, (HIDDEN,), dtype=jnp.float32)
    W2 = 0.05 * jax.random.normal(k_w2, (HIDDEN, D), dtype=jnp.float32)

    # Diffusion bookkeeping (unused by forward, kept for module fidelity).
    alphas_cumprod = jnp.linspace(0.999, 0.01, 1000, dtype=jnp.float32)
    timesteps = jnp.arange(0, 1000, 100, dtype=jnp.int32)

    x = jax.random.normal(k_x, (B, D), dtype=jnp.float32)
    t_dev = jnp.asarray(5.0, dtype=jnp.float32)   # device scalar: no per-call H2D

    h_func = HFuncSVD(V_mat)
    net = SyntheticEpsNet(W1, b1, W2)
    model = EpsilonNetSVD(net, alphas_cumprod, timesteps, h_func, shape)

    # Single-timestep forward (original module semantics).
    out = jax.block_until_ready(model.forward(x, t_dev))
    assert out.shape == (B, D)

    # Pure-JAX reference of the original (unfused, full-f32) forward.
    def ref_f32(xb, tv):
        h_img = (xb @ V_mat.T)                     # NCHW flatten is an identity
        eps = jnp.tanh(h_img @ W1 + jnp.float32(tv) * b1) @ W2
        return eps @ V_mat

    ref = ref_f32(x, 5.0)
    assert jnp.allclose(out, ref, atol=2e-2, rtol=2e-2), "mismatch vs f32 reference"

    # Tight check against the exact bf16-operand math the kernel performs.
    x16 = x.astype(jnp.bfloat16)
    h16 = jnp.tanh(
        jnp.dot(x16, model._w1f, preferred_element_type=jnp.float32) + 5.0 * b1
    )
    ref16 = jnp.dot(h16.astype(jnp.bfloat16), model._w2f,
                    preferred_element_type=jnp.float32)
    assert jnp.allclose(out, ref16, atol=1e-3, rtol=1e-3), "mismatch vs bf16 reference"

    # Batched multi-timestep forward: N (x, t) pairs in ONE kernel launch.
    N = 4
    xs = jax.random.normal(k_xs, (N, B, D), dtype=jnp.float32)
    ts = jnp.asarray([10.0, 5.0, 2.0, 1.0], dtype=jnp.float32)
    out_b = jax.block_until_ready(model.forward_batched(xs, ts))
    assert out_b.shape == (N, B, D)
    for i in range(N):
        ref_i = ref_f32(xs[i], float(ts[i]))
        assert jnp.allclose(out_b[i], ref_i, atol=2e-2, rtol=2e-2), \
            f"batched mismatch at step {i}"

    print("KERNEL_OK")
</pallas_src>

<mosaic_0001>
module attributes {stable_mosaic.version = 11 : i64} {
  func.func @_matmul_kernel(%arg0: i32, %arg1: i32, %arg2: i32, %arg3: memref<256x256xf32, #tpu.memory_space<vmem>>, %arg4: memref<256x128xf32, #tpu.memory_space<vmem>>, %arg5: memref<256x128xf32, #tpu.memory_space<vmem>>, %arg6: memref<256x128xf32, #tpu.memory_space<vmem>>) attributes {dimension_semantics = [#tpu.dimension_semantics<parallel>, #tpu.dimension_semantics<parallel>, #tpu.dimension_semantics<arbitrary>], iteration_bounds = array<i64: 1, 1, 1>, scalar_prefetch = 0 : i64, scratch_operands = 1 : i64, tpu.core_type = #tpu.core_type<tc>, window_params = [{transform_indices = @transform_0, window_bounds = array<i64: 256, 256>}, {transform_indices = @transform_1, window_bounds = array<i64: 256, 128>}, {transform_indices = @transform_2, window_bounds = array<i64: 256, 128>}]} {
    %c0_i32 = arith.constant 0 : i32
    %0 = arith.cmpi eq, %arg2, %c0_i32 : i32
    %1 = arith.extui %0 : i1 to i32
    %c0_i32_0 = arith.constant 0 : i32
    %2 = arith.cmpi ne, %1, %c0_i32_0 : i32
    scf.if %2 {
      %cst_10 = arith.constant 0.000000e+00 : f32
      %12 = vector.broadcast %cst_10 : f32 to vector<256x128xf32>
      %c0_11 = arith.constant 0 : index
      %c0_12 = arith.constant 0 : index
      %13 = vector.load %arg6[%c0_11, %c0_12] : memref<256x128xf32, #tpu.memory_space<vmem>>, vector<256x128xf32>
      tpu.vector_store %arg6[%c0_11, %c0_12], %12 {strides = array<i32>} : memref<256x128xf32, #tpu.memory_space<vmem>>, vector<256x128xf32>,
    } else {
    }
    %c0 = arith.constant 0 : index
    %c0_1 = arith.constant 0 : index
    %3 = vector.load %arg6[%c0, %c0_1] : memref<256x128xf32, #tpu.memory_space<vmem>>, vector<256x128xf32>
    %c0_2 = arith.constant 0 : index
    %c0_3 = arith.constant 0 : index
    %4 = vector.load %arg3[%c0_2, %c0_3] : memref<256x256xf32, #tpu.memory_space<vmem>>, vector<256x256xf32>
    %c0_4 = arith.constant 0 : index
    %c0_5 = arith.constant 0 : index
    %5 = vector.load %arg4[%c0_4, %c0_5] : memref<256x128xf32, #tpu.memory_space<vmem>>, vector<256x128xf32>
    %cst = arith.constant dense<0.000000e+00> : vector<256x128xf32>
    %6 = tpu.matmul %4, %5, %cst {dimension_numbers = #tpu.dot_dimension_numbers<[1], [0], [0], [1], [0, 0, 1, 1], [], []>} : vector<256x256xf32>, vector<256x128xf32>, vector<256x128xf32> -> vector<256x128xf32>
    %7 = arith.addf %3, %6 : vector<256x128xf32>
    %c0_6 = arith.constant 0 : index
    %c0_7 = arith.constant 0 : index
    %8 = vector.load %arg6[%c0_6, %c0_7] : memref<256x128xf32, #tpu.memory_space<vmem>>, vector<256x128xf32>
    tpu.vector_store %arg6[%c0_6, %c0_7], %7 {strides = array<i32>} : memref<256x128xf32, #tpu.memory_space<vmem>>, vector<256x128xf32>,
    %c0_i32_8 = arith.constant 0 : i32
    %9 = arith.cmpi eq, %arg2, %c0_i32_8 : i32
    %10 = arith.extui %9 : i1 to i32
    %c0_i32_9 = arith.constant 0 : i32
    %11 = arith.cmpi ne, %10, %c0_i32_9 : i32
    scf.if %11 {
      %c0_10 = arith.constant 0 : index
      %c0_11 = arith.constant 0 : index
      %12 = vector.load %arg6[%c0_10, %c0_11] : memref<256x128xf32, #tpu.memory_space<vmem>>, vector<256x128xf32>
      %c0_12 = arith.constant 0 : index
      %c0_13 = arith.constant 0 : index
      %13 = vector.load %arg5[%c0_12, %c0_13] : memref<256x128xf32, #tpu.memory_space<vmem>>, vector<256x128xf32>
      tpu.vector_store %arg5[%c0_12, %c0_13], %12 {strides = array<i32>} : memref<256x128xf32, #tpu.memory_space<vmem>>, vector<256x128xf32>,
    } else {
    }
    return
  }
  func.func @transform_0(%arg0: i32, %arg1: i32, %arg2: i32) -> (i32, i32) {
    %c0_i32 = arith.constant 0 : i32
    return %arg0, %arg2 : i32, i32
  }
  func.func @transform_1(%arg0: i32, %arg1: i32, %arg2: i32) -> (i32, i32) {
    %c0_i32 = arith.constant 0 : i32
    return %arg2, %arg1 : i32, i32
  }
  func.func @transform_2(%arg0: i32, %arg1: i32, %arg2: i32) -> (i32, i32) {
    %c0_i32 = arith.constant 0 : i32
    return %arg0, %arg1 : i32, i32
  }
}

</mosaic_0001>

<llo_original>
// kernel: pallas_matmul.1
$region0: #{pallas_matmul.1}
  #allocation0 [shape = 'u32[]', space=smem, size = 0x4, offset = 0x4, fixed_abs, tag = 'smem constant byte address 0x4 - core index']
  #allocation1 [shape = 'u32[144,128]{1,0:T(1,128)}', space=vmem, size = 0x12000, scoped, tag = 'internal scratch']
  #allocation2 [shape = 'f32[256,128]{1,0:T(8,128)}', space=vmem, size = 0x20000, scoped, tag = 'scratch operand']
  %s0 = inlined_call_operand.hbm [shape: f32[256,256], index: 0, kind: input, shape index: {}]
  %s1 = inlined_call_operand.hbm [shape: f32[256,128], index: 1, kind: input, shape index: {}]
  %s2 = inlined_call_operand.hbm [shape: f32[256,128], index: 2, kind: output, shape index: {}]
  %s3 = sld [smem:[#allocation0]]
  $region34: #{pallas_matmul.1} parent=0
    _
  %s5 = ssub.s32 1, %s3
  %s6 = scalar_select 0, %s5, %s3
  $region1: #{pallas_matmul.1} parent=0
    #allocation3 [shape = 'u8[262144]{0}', space=vmem, size = 0x40000, scoped, tag = 'input window, operand 0, single buffered']
    #allocation4 [shape = 's32[1]{0}', space=sflag, size = 0x4, scoped, tag = 'scoped memory for pallas_matmul.1']
    #allocation5 [shape = 's32[1]{0}', space=sflag, size = 0x4, scoped, tag = 'scoped memory for pallas_matmul.1']
    #allocation6 [shape = 'u8[131072]{0}', space=vmem, size = 0x20000, scoped, tag = 'input window, operand 1, single buffered']
    #allocation7 [shape = 's32[1]{0}', space=sflag, size = 0x4, scoped, tag = 'scoped memory for pallas_matmul.1']
    #allocation8 [shape = 'u8[131072]{0}', space=vmem, size = 0x20000, scoped, tag = 'output window, operand 0, single buffered']
    %7 = vsyncpa [#allocation4], 0
    %8 = vsyncpa [#allocation7], 0
    %9 = vsyncpa [#allocation5], 0
    // Predicated region
    $region2: #{pallas_matmul.1} parent=1 // pred_check
      _
    $region3: #{pallas_matmul.1} parent=1 // pred_check_branch
      %11 = sbr.rel (0) target = $region5
    $region4: #{pallas_matmul.1} parent=1 // pred_region
      %s13 = ssub.s32 8192, 8192
      %14 = vsyncadd [#allocation4], %s13
      %s15 = sshll.u32 [#allocation3], 4
      %s16 = int_to_ptr.vmem [resolvable:$true] %s15
      %21 = dma.hbm_to_vmem [thread:$0]  %s0, 8192, %s16, [#allocation4], 256, 256, 16
    $region5: #{pallas_matmul.1} parent=1 // pred_fallthru
      _
    // Predicated region
    $region6: #{pallas_matmul.1} parent=1 // pred_check
      _
    $region7: #{pallas_matmul.1} parent=1 // pred_check_branch
      %23 = sbr.rel (0) target = $region9
    $region8: #{pallas_matmul.1} parent=1 // pred_region
      %s25 = ssub.s32 4096, 4096
      %26 = vsyncadd [#allocation7], %s25
      %s27 = sshll.u32 [#allocation6], 4
      %s28 = int_to_ptr.vmem [resolvable:$true] %s27
      %33 = dma.hbm_to_vmem [thread:$0]  %s1, 4096, %s28, [#allocation7], 128, 128, 8
    $region9: #{pallas_matmul.1} parent=1 // pred_fallthru
      _
    // Predicated region
    $region10: #{pallas_matmul.1} parent=1 // pred_check
      _
    $region11: #{pallas_matmul.1} parent=1 // pred_check_branch
      %35 = sbr.rel (0) target = $region13
    $region12: #{pallas_matmul.1} parent=1 // pred_region
      %36 = dma.done [#allocation4], 8192
    $region13: #{pallas_matmul.1} parent=1 // pred_fallthru
      _
    // Predicated region
    $region14: #{pallas_matmul.1} parent=1 // pred_check
      _
    $region15: #{pallas_matmul.1} parent=1 // pred_check_branch
      %38 = sbr.rel (0) target = $region17
    $region16: #{pallas_matmul.1} parent=1 // pred_region
      %39 = dma.done [#allocation7], 4096
    $region17: #{pallas_matmul.1} parent=1 // pred_fallthru
      _
    %p40 = scmp.eq.s32.totalorder 0, 0
    // Predicated region
    $region18: #{pallas_matmul.1} parent=1 // pred_check
      %p41 = pneg %p40
    $region19: #{pallas_matmul.1} parent=1 // pred_check_branch
      %43 = sbr.rel (%p41) target = $region21
    $region20: #{pallas_matmul.1} parent=1 // pred_region
      %44 = vst [vmem:[#allocation2] sm:$0xff] 0.0
      %45 = vst [vmem:[#allocation2 + $0x8] sm:$0xff] 0.0
      %46 = vst [vmem:[#allocation2 + $0x10] sm:$0xff] 0.0
      %47 = vst [vmem:[#allocation2 + $0x18] sm:$0xff] 0.0
      %48 = vst [vmem:[#allocation2 + $0x20] sm:$0xff] 0.0
      %49 = vst [vmem:[#allocation2 + $0x28] sm:$0xff] 0.0
      %50 = vst [vmem:[#allocation2 + $0x30] sm:$0xff] 0.0
      %51 = vst [vmem:[#allocation2 + $0x38] sm:$0xff] 0.0
      %52 = vst [vmem:[#allocation2 + $0x40] sm:$0xff] 0.0
      %53 = vst [vmem:[#allocation2 + $0x48] sm:$0xff] 0.0
      %54 = vst [vmem:[#allocation2 + $0x50] sm:$0xff] 0.0
      %55 = vst [vmem:[#allocation2 + $0x58] sm:$0xff] 0.0
      %56 = vst [vmem:[#allocation2 + $0x60] sm:$0xff] 0.0
      %57 = vst [vmem:[#allocation2 + $0x68] sm:$0xff] 0.0
      %58 = vst [vmem:[#allocation2 + $0x70] sm:$0xff] 0.0
      %59 = vst [vmem:[#allocation2 + $0x78] sm:$0xff] 0.0
      %60 = vst [vmem:[#allocation2 + $0x80] sm:$0xff] 0.0
      %61 = vst [vmem:[#allocation2 + $0x88] sm:$0xff] 0.0
      %62 = vst [vmem:[#allocation2 + $0x90] sm:$0xff] 0.0
      %63 = vst [vmem:[#allocation2 + $0x98] sm:$0xff] 0.0
      %64 = vst [vmem:[#allocation2 + $0xa0] sm:$0xff] 0.0
      %65 = vst [vmem:[#allocation2 + $0xa8] sm:$0xff] 0.0
      %66 = vst [vmem:[#allocation2 + $0xb0] sm:$0xff] 0.0
      %67 = vst [vmem:[#allocation2 + $0xb8] sm:$0xff] 0.0
      %68 = vst [vmem:[#allocation2 + $0xc0] sm:$0xff] 0.0
      %69 = vst [vmem:[#allocation2 + $0xc8] sm:$0xff] 0.0
      %70 = vst [vmem:[#allocation2 + $0xd0] sm:$0xff] 0.0
      %71 = vst [vmem:[#allocation2 + $0xd8] sm:$0xff] 0.0
      %72 = vst [vmem:[#allocation2 + $0xe0] sm:$0xff] 0.0
      %73 = vst [vmem:[#allocation2 + $0xe8] sm:$0xff] 0.0
      %74 = vst [vmem:[#allocation2 + $0xf0] sm:$0xff] 0.0
      %75 = vst [vmem:[#allocation2 + $0xf8] sm:$0xff] 0.0
    $region21: #{pallas_matmul.1} parent=1 // pred_fallthru
      _
    %v76 = vld [vmem:[#allocation2] sm:$0xff]
    %v77 = vld [vmem:[#allocation2 + $0x8] sm:$0xff]
    %v78 = vld [vmem:[#allocation2 + $0x10] sm:$0xff]
    %v79 = vld [vmem:[#allocation2 + $0x18] sm:$0xff]
    %v80 = vld [vmem:[#allocation2 + $0x20] sm:$0xff]
    %v81 = vld [vmem:[#allocation2 + $0x28] sm:$0xff]
    %v82 = vld [vmem:[#allocation2 + $0x30] sm:$0xff]
    %v83 = vld [vmem:[#allocation2 + $0x38] sm:$0xff]
    %v84 = vld [vmem:[#allocation2 + $0x40] sm:$0xff]
    %v85 = vld [vmem:[#allocation2 + $0x48] sm:$0xff]
    %v86 = vld [vmem:[#allocation2 + $0x50] sm:$0xff]
    %v87 = vld [vmem:[#allocation2 + $0x58] sm:$0xff]
    %v88 = vld [vmem:[#allocation2 + $0x60] sm:$0xff]
    %v89 = vld [vmem:[#allocation2 + $0x68] sm:$0xff]
    %v90 = vld [vmem:[#allocation2 + $0x70] sm:$0xff]
    %v91 = vld [vmem:[#allocation2 + $0x78] sm:$0xff]
    %v92 = vld [vmem:[#allocation2 + $0x80] sm:$0xff]
    %v93 = vld [vmem:[#allocation2 + $0x88] sm:$0xff]
    %v94 = vld [vmem:[#allocation2 + $0x90] sm:$0xff]
    %v95 = vld [vmem:[#allocation2 + $0x98] sm:$0xff]
    %v96 = vld [vmem:[#allocation2 + $0xa0] sm:$0xff]
    %v97 = vld [vmem:[#allocation2 + $0xa8] sm:$0xff]
    %v98 = vld [vmem:[#allocation2 + $0xb0] sm:$0xff]
    %v99 = vld [vmem:[#allocation2 + $0xb8] sm:$0xff]
    %v100 = vld [vmem:[#allocation2 + $0xc0] sm:$0xff]
    %v101 = vld [vmem:[#allocation2 + $0xc8] sm:$0xff]
    %v102 = vld [vmem:[#allocation2 + $0xd0] sm:$0xff]
    %v103 = vld [vmem:[#allocation2 + $0xd8] sm:$0xff]
    %v104 = vld [vmem:[#allocation2 + $0xe0] sm:$0xff]
    %v105 = vld [vmem:[#allocation2 + $0xe8] sm:$0xff]
    %v106 = vld [vmem:[#allocation2 + $0xf0] sm:$0xff]
    %v107 = vld [vmem:[#allocation2 + $0xf8] sm:$0xff]
    %v108 = vld [vmem:[#allocation3] sm:$0xff]
    %v109 = vld [vmem:[#allocation3 + $0x8] sm:$0xff]
    %v110 = vld [vmem:[#allocation3 + $0x10] sm:$0xff]
    %v111 = vld [vmem:[#allocation3 + $0x18] sm:$0xff]
    %v112 = vld [vmem:[#allocation3 + $0x20] sm:$0xff]
    %v113 = vld [vmem:[#allocation3 + $0x28] sm:$0xff]
    %v114 = vld [vmem:[#allocation3 + $0x30] sm:$0xff]
    %v115 = vld [vmem:[#allocation3 + $0x38] sm:$0xff]
    %v116 = vld [vmem:[#allocation3 + $0x40] sm:$0xff]
    %v117 = vld [vmem:[#allocation3 + $0x48] sm:$0xff]
    %v118 = vld [vmem:[#allocation3 + $0x50] sm:$0xff]
    %v119 = vld [vmem:[#allocation3 + $0x58] sm:$0xff]
    %v120 = vld [vmem:[#allocation3 + $0x60] sm:$0xff]
    %v121 = vld [vmem:[#allocation3 + $0x68] sm:$0xff]
    %v122 = vld [vmem:[#allocation3 + $0x70] sm:$0xff]
    %v123 = vld [vmem:[#allocation3 + $0x78] sm:$0xff]
    %v124 = vld [vmem:[#allocation3 + $0x80] sm:$0xff]
    %v125 = vld [vmem:[#allocation3 + $0x88] sm:$0xff]
    %v126 = vld [vmem:[#allocation3 + $0x90] sm:$0xff]
    %v127 = vld [vmem:[#allocation3 + $0x98] sm:$0xff]
    %v128 = vld [vmem:[#allocation3 + $0xa0] sm:$0xff]
    %v129 = vld [vmem:[#allocation3 + $0xa8] sm:$0xff]
    %v130 = vld [vmem:[#allocation3 + $0xb0] sm:$0xff]
    %v131 = vld [vmem:[#allocation3 + $0xb8] sm:$0xff]
    %v132 = vld [vmem:[#allocation3 + $0xc0] sm:$0xff]
    %v133 = vld [vmem:[#allocation3 + $0xc8] sm:$0xff]
    %v134 = vld [vmem:[#allocation3 + $0xd0] sm:$0xff]
    %v135 = vld [vmem:[#allocation3 + $0xd8] sm:$0xff]
    %v136 = vld [vmem:[#allocation3 + $0xe0] sm:$0xff]
    %v137 = vld [vmem:[#allocation3 + $0xe8] sm:$0xff]
    %v138 = vld [vmem:[#allocation3 + $0xf0] sm:$0xff]
    %v139 = vld [vmem:[#allocation3 + $0xf8] sm:$0xff]
    %v140 = vld [vmem:[#allocation3 + $0x100] sm:$0xff]
    %v141 = vld [vmem:[#allocation3 + $0x108] sm:$0xff]
    %v142 = vld [vmem:[#allocation3 + $0x110] sm:$0xff]
    %v143 = vld [vmem:[#allocation3 + $0x118] sm:$0xff]
    %v144 = vld [vmem:[#allocation3 + $0x120] sm:$0xff]
    %v145 = vld [vmem:[#allocation3 + $0x128] sm:$0xff]
    %v146 = vld [vmem:[#allocation3 + $0x130] sm:$0xff]
    %v147 = vld [vmem:[#allocation3 + $0x138] sm:$0xff]
    %v148 = vld [vmem:[#allocation3 + $0x140] sm:$0xff]
    %v149 = vld [vmem:[#allocation3 + $0x148] sm:$0xff]
    %v150 = vld [vmem:[#allocation3 + $0x150] sm:$0xff]
    %v151 = vld [vmem:[#allocation3 + $0x158] sm:$0xff]
    %v152 = vld [vmem:[#allocation3 + $0x160] sm:$0xff]
    %v153 = vld [vmem:[#allocation3 + $0x168] sm:$0xff]
    %v154 = vld [vmem:[#allocation3 + $0x170] sm:$0xff]
    %v155 = vld [vmem:[#allocation3 + $0x178] sm:$0xff]
    %v156 = vld [vmem:[#allocation3 + $0x180] sm:$0xff]
    %v157 = vld [vmem:[#allocation3 + $0x188] sm:$0xff]
    %v158 = vld [vmem:[#allocation3 + $0x190] sm:$0xff]
    %v159 = vld [vmem:[#allocation3 + $0x198] sm:$0xff]
    %v160 = vld [vmem:[#allocation3 + $0x1a0] sm:$0xff]
    %v161 = vld [vmem:[#allocation3 + $0x1a8] sm:$0xff]
    %v162 = vld [vmem:[#allocation3 + $0x1b0] sm:$0xff]
    %v163 = vld [vmem:[#allocation3 + $0x1b8] sm:$0xff]
    %v164 = vld [vmem:[#allocation3 + $0x1c0] sm:$0xff]
    %v165 = vld [vmem:[#allocation3 + $0x1c8] sm:$0xff]
    %v166 = vld [vmem:[#allocation3 + $0x1d0] sm:$0xff]
    %v167 = vld [vmem:[#allocation3 + $0x1d8] sm:$0xff]
    %v168 = vld [vmem:[#allocation3 + $0x1e0] sm:$0xff]
    %v169 = vld [vmem:[#allocation3 + $0x1e8] sm:$0xff]
    %v170 = vld [vmem:[#allocation3 + $0x1f0] sm:$0xff]
    %v171 = vld [vmem:[#allocation3 + $0x1f8] sm:$0xff]
    %v172 = vld [vmem:[#allocation6] sm:$0xff]
    %v173 = vld [vmem:[#allocation6 + $0x8] sm:$0xff]
    %v174 = vld [vmem:[#allocation6 + $0x10] sm:$0xff]
    %v175 = vld [vmem:[#allocation6 + $0x18] sm:$0xff]
    %v176 = vld [vmem:[#allocation6 + $0x20] sm:$0xff]
    %v177 = vld [vmem:[#allocation6 + $0x28] sm:$0xff]
    %v178 = vld [vmem:[#allocation6 + $0x30] sm:$0xff]
    %v179 = vld [vmem:[#allocation6 + $0x38] sm:$0xff]
    %v180 = vld [vmem:[#allocation6 + $0x40] sm:$0xff]
    %v181 = vld [vmem:[#allocation6 + $0x48] sm:$0xff]
    %v182 = vld [vmem:[#allocation6 + $0x50] sm:$0xff]
    %v183 = vld [vmem:[#allocation6 + $0x58] sm:$0xff]
    %v184 = vld [vmem:[#allocation6 + $0x60] sm:$0xff]
    %v185 = vld [vmem:[#allocation6 + $0x68] sm:$0xff]
    %v186 = vld [vmem:[#allocation6 + $0x70] sm:$0xff]
    %v187 = vld [vmem:[#allocation6 + $0x78] sm:$0xff]
    %v188 = vld [vmem:[#allocation6 + $0x80] sm:$0xff]
    %v189 = vld [vmem:[#allocation6 + $0x88] sm:$0xff]
    %v190 = vld [vmem:[#allocation6 + $0x90] sm:$0xff]
    %v191 = vld [vmem:[#allocation6 + $0x98] sm:$0xff]
    %v192 = vld [vmem:[#allocation6 + $0xa0] sm:$0xff]
    %v193 = vld [vmem:[#allocation6 + $0xa8] sm:$0xff]
    %v194 = vld [vmem:[#allocation6 + $0xb0] sm:$0xff]
    %v195 = vld [vmem:[#allocation6 + $0xb8] sm:$0xff]
    %v196 = vld [vmem:[#allocation6 + $0xc0] sm:$0xff]
    %v197 = vld [vmem:[#allocation6 + $0xc8] sm:$0xff]
    %v198 = vld [vmem:[#allocation6 + $0xd0] sm:$0xff]
    %v199 = vld [vmem:[#allocation6 + $0xd8] sm:$0xff]
    %v200 = vld [vmem:[#allocation6 + $0xe0] sm:$0xff]
    %v201 = vld [vmem:[#allocation6 + $0xe8] sm:$0xff]
    %v202 = vld [vmem:[#allocation6 + $0xf0] sm:$0xff]
    %v203 = vld [vmem:[#allocation6 + $0xf8] sm:$0xff]
    %204 = vmatprep.subr.mxu0 0.0
    %205 = vmatpush1.msra.mxu0 %v187
    %206 = vmatprep.subr.mxu0 0.0
    %207 = vmatpush1.msra.mxu0 %v186
    %208 = vmatprep.subr.mxu0 0.0
    %209 = vmatpush1.msra.mxu0 %v185
    %210 = vmatprep.subr.mxu0 0.0
    %211 = vmatpush1.msra.mxu0 %v184
    %212 = vmatprep.subr.mxu0 0.0
    %213 = vmatpush1.msra.mxu0 %v183
    %214 = vmatprep.subr.mxu0 0.0
    %215 = vmatpush1.msra.mxu0 %v182
    %216 = vmatprep.subr.mxu0 0.0
    %217 = vmatpush1.msra.mxu0 %v181
    %218 = vmatprep.subr.mxu0 0.0
    %219 = vmatpush1.msra.mxu0 %v180
    %220 = vmatprep.subr.mxu0 0.0
    %221 = vmatpush1.msra.mxu0 %v179
    %222 = vmatprep.subr.mxu0 0.0
    %223 = vmatpush1.msra.mxu0 %v178
    %224 = vmatprep.subr.mxu0 0.0
    %225 = vmatpush1.msra.mxu0 %v177
    %226 = vmatprep.subr.mxu0 0.0
    %227 = vmatpush1.msra.mxu0 %v176
    %228 = vmatprep.subr.mxu0 0.0
    %229 = vmatpush1.msra.mxu0 %v175
    %230 = vmatprep.subr.mxu0 0.0
    %231 = vmatpush1.msra.mxu0 %v174
    %232 = vmatprep.subr.mxu0 0.0
    %233 = vmatpush1.msra.mxu0 %v173
    %234 = vmatprep.subr.mxu0 0.0
    %235 = vmatpush1.msra.mxu0 %v172
    %236 = vmatprep.subr.mxu0 0.0
    %237 = vmatpush2.msra.mxu0 %v203
    %238 = vmatprep.subr.mxu0 0.0
    %239 = vmatpush2.msra.mxu0 %v202
    %240 = vmatprep.subr.mxu0 0.0
    %241 = vmatpush2.msra.mxu0 %v201
    %242 = vmatprep.subr.mxu0 0.0
    %243 = vmatpush2.msra.mxu0 %v200
    %244 = vmatprep.subr.mxu0 0.0
    %245 = vmatpush2.msra.mxu0 %v199
    %246 = vmatprep.subr.mxu0 0.0
    %247 = vmatpush2.msra.mxu0 %v198
    %248 = vmatprep.subr.mxu0 0.0
    %249 = vmatpush2.msra.mxu0 %v197
    %250 = vmatprep.subr.mxu0 0.0
    %251 = vmatpush2.msra.mxu0 %v196
    %252 = vmatprep.subr.mxu0 0.0
    %253 = vmatpush2.msra.mxu0 %v195
    %254 = vmatprep.subr.mxu0 0.0
    %255 = vmatpush2.msra.mxu0 %v194
    %256 = vmatprep.subr.mxu0 0.0
    %257 = vmatpush2.msra.mxu0 %v193
    %258 = vmatprep.subr.mxu0 0.0
    %259 = vmatpush2.msra.mxu0 %v192
    %260 = vmatprep.subr.mxu0 0.0
    %261 = vmatpush2.msra.mxu0 %v191
    %262 = vmatprep.subr.mxu0 0.0
    %263 = vmatpush2.msra.mxu0 %v190
    %264 = vmatprep.subr.mxu0 0.0
    %265 = vmatpush2.msra.mxu0 %v189
    %266 = vmatprep.subr.mxu0 0.0
    %267 = vmatpush2.msra.mxu0 %v188
    %268 = vmatprep.mubr.f32.mxu0 %v109
    %269 = vmatmul.mubr.f32.gmra.mxu0 %v108
    %v270 = vpop.f32.mrf.mxu0
    %v271 = vadd.f32 0.0, %v270
    %v272 = vpop.f32.mrf.mxu0
    %273 = vmatprep.mubr.f32.mxu0 %v111
    %274 = vmatmul.mubr.f32.gmra.mxu0 %v110
    %v275 = vpop.f32.mrf.mxu0
    %v276 = vadd.f32 0.0, %v275
    %v277 = vpop.f32.mrf.mxu0
    %278 = vmatprep.mubr.f32.mxu0 %v113
    %279 = vmatmul.mubr.f32.gmra.mxu0 %v112
    %v280 = vpop.f32.mrf.mxu0
    %v281 = vadd.f32 0.0, %v280
    %v282 = vpop.f32.mrf.mxu0
    %283 = vmatprep.mubr.f32.mxu0 %v115
    %284 = vmatmul.mubr.f32.gmra.mxu0 %v114
    %v285 = vpop.f32.mrf.mxu0
    %v286 = vadd.f32 0.0, %v285
    %v287 = vpop.f32.mrf.mxu0
    %288 = vmatprep.mubr.f32.mxu0 %v117
    %289 = vmatmul.mubr.f32.gmra.mxu0 %v116
    %v290 = vpop.f32.mrf.mxu0
    %v291 = vadd.f32 0.0, %v290
    %v292 = vpop.f32.mrf.mxu0
    %293 = vmatprep.mubr.f32.mxu0 %v119
    %294 = vmatmul.mubr.f32.gmra.mxu0 %v118
    %v295 = vpop.f32.mrf.mxu0
    %v296 = vadd.f32 0.0, %v295
    %v297 = vpop.f32.mrf.mxu0
    %298 = vmatprep.mubr.f32.mxu0 %v121
    %299 = vmatmul.mubr.f32.gmra.mxu0 %v120
    %v300 = vpop.f32.mrf.mxu0
    %v301 = vadd.f32 0.0, %v300
    %v302 = vpop.f32.mrf.mxu0
    %303 = vmatprep.mubr.f32.mxu0 %v123
    %304 = vmatmul.mubr.f32.gmra.mxu0 %v122
    %v305 = vpop.f32.mrf.mxu0
    %v306 = vadd.f32 0.0, %v305
    %v307 = vpop.f32.mrf.mxu0
    %308 = vmatprep.mubr.f32.mxu0 %v125
    %309 = vmatmul.mubr.f32.gmra.mxu0 %v124
    %v310 = vpop.f32.mrf.mxu0
    %v311 = vadd.f32 0.0, %v310
    %v312 = vpop.f32.mrf.mxu0
    %313 = vmatprep.mubr.f32.mxu0 %v127
    %314 = vmatmul.mubr.f32.gmra.mxu0 %v126
    %v315 = vpop.f32.mrf.mxu0
    %v316 = vadd.f32 0.0, %v315
    %v317 = vpop.f32.mrf.mxu0
    %318 = vmatprep.mubr.f32.mxu0 %v129
    %319 = vmatmul.mubr.f32.gmra.mxu0 %v128
    %v320 = vpop.f32.mrf.mxu0
    %v321 = vadd.f32 0.0, %v320
    %v322 = vpop.f32.mrf.mxu0
    %323 = vmatprep.mubr.f32.mxu0 %v131
    %324 = vmatmul.mubr.f32.gmra.mxu0 %v130
    %v325 = vpop.f32.mrf.mxu0
    %v326 = vadd.f32 0.0, %v325
    %v327 = vpop.f32.mrf.mxu0
    %328 = vmatprep.mubr.f32.mxu0 %v133
    %329 = vmatmul.mubr.f32.gmra.mxu0 %v132
    %v330 = vpop.f32.mrf.mxu0
    %v331 = vadd.f32 0.0, %v330
    %v332 = vpop.f32.mrf.mxu0
    %333 = vmatprep.mubr.f32.mxu0 %v135
    %334 = vmatmul.mubr.f32.gmra.mxu0 %v134
    %v335 = vpop.f32.mrf.mxu0
    %v336 = vadd.f32 0.0, %v335
    %v337 = vpop.f32.mrf.mxu0
    %338 = vmatprep.mubr.f32.mxu0 %v137
    %339 = vmatmul.mubr.f32.gmra.mxu0 %v136
    %v340 = vpop.f32.mrf.mxu0
    %v341 = vadd.f32 0.0, %v340
    %v342 = vpop.f32.mrf.mxu0
    %343 = vmatprep.mubr.f32.mxu0 %v139
    %344 = vmatmul.mubr.f32.gmra.mxu0 %v138
    %v345 = vpop.f32.mrf.mxu0
    %v346 = vadd.f32 0.0, %v345
    %v347 = vpop.f32.mrf.mxu0
    %348 = vmatprep.mubr.f32.mxu0 %v141
    %349 = vmatmul.mubr.f32.gmra.mxu0 %v140
    %v350 = vpop.f32.mrf.mxu0
    %v351 = vadd.f32 0.0, %v350
    %v352 = vpop.f32.mrf.mxu0
    %353 = vmatprep.mubr.f32.mxu0 %v143
    %354 = vmatmul.mubr.f32.gmra.mxu0 %v142
    %v355 = vpop.f32.mrf.mxu0
    %v356 = vadd.f32 0.0, %v355
    %v357 = vpop.f32.mrf.mxu0
    %358 = vmatprep.mubr.f32.mxu0 %v145
    %359 = vmatmul.mubr.f32.gmra.mxu0 %v144
    %v360 = vpop.f32.mrf.mxu0
    %v361 = vadd.f32 0.0, %v360
    %v362 = vpop.f32.mrf.mxu0
    %363 = vmatprep.mubr.f32.mxu0 %v147
    %364 = vmatmul.mubr.f32.gmra.mxu0 %v146
    %v365 = vpop.f32.mrf.mxu0
    %v366 = vadd.f32 0.0, %v365
    %v367 = vpop.f32.mrf.mxu0
    %368 = vmatprep.mubr.f32.mxu0 %v149
    %369 = vmatmul.mubr.f32.gmra.mxu0 %v148
    %v370 = vpop.f32.mrf.mxu0
    %v371 = vadd.f32 0.0, %v370
    %v372 = vpop.f32.mrf.mxu0
    %373 = vmatprep.mubr.f32.mxu0 %v151
    %374 = vmatmul.mubr.f32.gmra.mxu0 %v150
    %v375 = vpop.f32.mrf.mxu0
    %v376 = vadd.f32 0.0, %v375
    %v377 = vpop.f32.mrf.mxu0
    %378 = vmatprep.mubr.f32.mxu0 %v153
    %379 = vmatmul.mubr.f32.gmra.mxu0 %v152
    %v380 = vpop.f32.mrf.mxu0
    %v381 = vadd.f32 0.0, %v380
    %v382 = vpop.f32.mrf.mxu0
    %383 = vmatprep.mubr.f32.mxu0 %v155
    %384 = vmatmul.mubr.f32.gmra.mxu0 %v154
    %v385 = vpop.f32.mrf.mxu0
    %v386 = vadd.f32 0.0, %v385
    %v387 = vpop.f32.mrf.mxu0
    %388 = vmatprep.mubr.f32.mxu0 %v157
    %389 = vmatmul.mubr.f32.gmra.mxu0 %v156
    %v390 = vpop.f32.mrf.mxu0
    %v391 = vadd.f32 0.0, %v390
    %v392 = vpop.f32.mrf.mxu0
    %393 = vmatprep.mubr.f32.mxu0 %v159
    %394 = vmatmul.mubr.f32.gmra.mxu0 %v158
    %v395 = vpop.f32.mrf.mxu0
    %v396 = vadd.f32 0.0, %v395
    %v397 = vpop.f32.mrf.mxu0
    %398 = vmatprep.mubr.f32.mxu0 %v161
    %399 = vmatmul.mubr.f32.gmra.mxu0 %v160
    %v400 = vpop.f32.mrf.mxu0
    %v401 = vadd.f32 0.0, %v400
    %v402 = vpop.f32.mrf.mxu0
    %403 = vmatprep.mubr.f32.mxu0 %v163
    %404 = vmatmul.mubr.f32.gmra.mxu0 %v162
    %v405 = vpop.f32.mrf.mxu0
    %v406 = vadd.f32 0.0, %v405
    %v407 = vpop.f32.mrf.mxu0
    %408 = vmatprep.mubr.f32.mxu0 %v165
    %409 = vmatmul.mubr.f32.gmra.mxu0 %v164
    %v410 = vpop.f32.mrf.mxu0
    %v411 = vadd.f32 0.0, %v410
    %v412 = vpop.f32.mrf.mxu0
    %413 = vmatprep.mubr.f32.mxu0 %v167
    %414 = vmatmul.mubr.f32.gmra.mxu0 %v166
    %v415 = vpop.f32.mrf.mxu0
    %v416 = vadd.f32 0.0, %v415
    %v417 = vpop.f32.mrf.mxu0
    %418 = vmatprep.mubr.f32.mxu0 %v169
    %419 = vmatmul.mubr.f32.gmra.mxu0 %v168
    %v420 = vpop.f32.mrf.mxu0
    %v421 = vadd.f32 0.0, %v420
    %v422 = vpop.f32.mrf.mxu0
    %423 = vmatprep.mubr.f32.mxu0 %v171
    %424 = vmatmul.mubr.f32.gmra.mxu0 %v170
    %v425 = vpop.f32.mrf.mxu0
    %v426 = vadd.f32 0.0, %v425
    %v427 = vpop.f32.mrf.mxu0
    %428 = vdwg.mxu0
    %v429 = vadd.f32 %v76, %v271
    %v430 = vadd.f32 %v77, %v276
    %v431 = vadd.f32 %v78, %v281
    %v432 = vadd.f32 %v79, %v286
    %v433 = vadd.f32 %v80, %v291
    %v434 = vadd.f32 %v81, %v296
    %v435 = vadd.f32 %v82, %v301
    %v436 = vadd.f32 %v83, %v306
    %v437 = vadd.f32 %v84, %v311
    %v438 = vadd.f32 %v85, %v316
    %v439 = vadd.f32 %v86, %v321
    %v440 = vadd.f32 %v87, %v326
    %v441 = vadd.f32 %v88, %v331
    %v442 = vadd.f32 %v89, %v336
    %v443 = vadd.f32 %v90, %v341
    %v444 = vadd.f32 %v91, %v346
    %v445 = vadd.f32 %v92, %v351
    %v446 = vadd.f32 %v93, %v356
    %v447 = vadd.f32 %v94, %v361
    %v448 = vadd.f32 %v95, %v366
    %v449 = vadd.f32 %v96, %v371
    %v450 = vadd.f32 %v97, %v376
    %v451 = vadd.f32 %v98, %v381
    %v452 = vadd.f32 %v99, %v386
    %v453 = vadd.f32 %v100, %v391
    %v454 = vadd.f32 %v101, %v396
    %v455 = vadd.f32 %v102, %v401
    %v456 = vadd.f32 %v103, %v406
    %v457 = vadd.f32 %v104, %v411
    %v458 = vadd.f32 %v105, %v416
    %v459 = vadd.f32 %v106, %v421
    %v460 = vadd.f32 %v107, %v426
    %461 = vst [vmem:[#allocation2] sm:$0xff] %v429
    %462 = vst [vmem:[#allocation2 + $0x8] sm:$0xff] %v430
    %463 = vst [vmem:[#allocation2 + $0x10] sm:$0xff] %v431
    %464 = vst [vmem:[#allocation2 + $0x18] sm:$0xff] %v432
    %465 = vst [vmem:[#allocation2 + $0x20] sm:$0xff] %v433
    %466 = vst [vmem:[#allocation2 + $0x28] sm:$0xff] %v434
    %467 = vst [vmem:[#allocation2 + $0x30] sm:$0xff] %v435
    %468 = vst [vmem:[#allocation2 + $0x38] sm:$0xff] %v436
    %469 = vst [vmem:[#allocation2 + $0x40] sm:$0xff] %v437
    %470 = vst [vmem:[#allocation2 + $0x48] sm:$0xff] %v438
    %471 = vst [vmem:[#allocation2 + $0x50] sm:$0xff] %v439
    %472 = vst [vmem:[#allocation2 + $0x58] sm:$0xff] %v440
    %473 = vst [vmem:[#allocation2 + $0x60] sm:$0xff] %v441
    %474 = vst [vmem:[#allocation2 + $0x68] sm:$0xff] %v442
    %475 = vst [vmem:[#allocation2 + $0x70] sm:$0xff] %v443
    %476 = vst [vmem:[#allocation2 + $0x78] sm:$0xff] %v444
    %477 = vst [vmem:[#allocation2 + $0x80] sm:$0xff] %v445
    %478 = vst [vmem:[#allocation2 + $0x88] sm:$0xff] %v446
    %479 = vst [vmem:[#allocation2 + $0x90] sm:$0xff] %v447
    %480 = vst [vmem:[#allocation2 + $0x98] sm:$0xff] %v448
    %481 = vst [vmem:[#allocation2 + $0xa0] sm:$0xff] %v449
    %482 = vst [vmem:[#allocation2 + $0xa8] sm:$0xff] %v450
    %483 = vst [vmem:[#allocation2 + $0xb0] sm:$0xff] %v451
    %484 = vst [vmem:[#allocation2 + $0xb8] sm:$0xff] %v452
    %485 = vst [vmem:[#allocation2 + $0xc0] sm:$0xff] %v453
    %486 = vst [vmem:[#allocation2 + $0xc8] sm:$0xff] %v454
    %487 = vst [vmem:[#allocation2 + $0xd0] sm:$0xff] %v455
    %488 = vst [vmem:[#allocation2 + $0xd8] sm:$0xff] %v456
    %489 = vst [vmem:[#allocation2 + $0xe0] sm:$0xff] %v457
    %490 = vst [vmem:[#allocation2 + $0xe8] sm:$0xff] %v458
    %491 = vst [vmem:[#allocation2 + $0xf0] sm:$0xff] %v459
    %492 = vst [vmem:[#allocation2 + $0xf8] sm:$0xff] %v460
    // Predicated region
    $region22: #{pallas_matmul.1} parent=1 // pred_check
      %p493 = pneg %p40
    $region23: #{pallas_matmul.1} parent=1 // pred_check_branch
      %495 = sbr.rel (%p493) target = $region25
    $region24: #{pallas_matmul.1} parent=1 // pred_region
      %v496 = vld [vmem:[#allocation2] sm:$0xff]
      %v497 = vld [vmem:[#allocation2 + $0x8] sm:$0xff]
      %v498 = vld [vmem:[#allocation2 + $0x10] sm:$0xff]
      %v499 = vld [vmem:[#allocation2 + $0x18] sm:$0xff]
      %v500 = vld [vmem:[#allocation2 + $0x20] sm:$0xff]
      %v501 = vld [vmem:[#allocation2 + $0x28] sm:$0xff]
      %v502 = vld [vmem:[#allocation2 + $0x30] sm:$0xff]
      %v503 = vld [vmem:[#allocation2 + $0x38] sm:$0xff]
      %v504 = vld [vmem:[#allocation2 + $0x40] sm:$0xff]
      %v505 = vld [vmem:[#allocation2 + $0x48] sm:$0xff]
      %v506 = vld [vmem:[#allocation2 + $0x50] sm:$0xff]
      %v507 = vld [vmem:[#allocation2 + $0x58] sm:$0xff]
      %v508 = vld [vmem:[#allocation2 + $0x60] sm:$0xff]
      %v509 = vld [vmem:[#allocation2 + $0x68] sm:$0xff]
      %v510 = vld [vmem:[#allocation2 + $0x70] sm:$0xff]
      %v511 = vld [vmem:[#allocation2 + $0x78] sm:$0xff]
      %v512 = vld [vmem:[#allocation2 + $0x80] sm:$0xff]
      %v513 = vld [vmem:[#allocation2 + $0x88] sm:$0xff]
      %v514 = vld [vmem:[#allocation2 + $0x90] sm:$0xff]
      %v515 = vld [vmem:[#allocation2 + $0x98] sm:$0xff]
      %v516 = vld [vmem:[#allocation2 + $0xa0] sm:$0xff]
      %v517 = vld [vmem:[#allocation2 + $0xa8] sm:$0xff]
      %v518 = vld [vmem:[#allocation2 + $0xb0] sm:$0xff]
      %v519 = vld [vmem:[#allocation2 + $0xb8] sm:$0xff]
      %v520 = vld [vmem:[#allocation2 + $0xc0] sm:$0xff]
      %v521 = vld [vmem:[#allocation2 + $0xc8] sm:$0xff]
      %v522 = vld [vmem:[#allocation2 + $0xd0] sm:$0xff]
      %v523 = vld [vmem:[#allocation2 + $0xd8] sm:$0xff]
      %v524 = vld [vmem:[#allocation2 + $0xe0] sm:$0xff]
      %v525 = vld [vmem:[#allocation2 + $0xe8] sm:$0xff]
      %v526 = vld [vmem:[#allocation2 + $0xf0] sm:$0xff]
      %v527 = vld [vmem:[#allocation2 + $0xf8] sm:$0xff]
      %528 = vst [vmem:[#allocation8] sm:$0xff] %v496
      %529 = vst [vmem:[#allocation8 + $0x8] sm:$0xff] %v497
      %530 = vst [vmem:[#allocation8 + $0x10] sm:$0xff] %v498
      %531 = vst [vmem:[#allocation8 + $0x18] sm:$0xff] %v499
      %532 = vst [vmem:[#allocation8 + $0x20] sm:$0xff] %v500
      %533 = vst [vmem:[#allocation8 + $0x28] sm:$0xff] %v501
      %534 = vst [vmem:[#allocation8 + $0x30] sm:$0xff] %v502
      %535 = vst [vmem:[#allocation8 + $0x38] sm:$0xff] %v503
      %536 = vst [vmem:[#allocation8 + $0x40] sm:$0xff] %v504
      %537 = vst [vmem:[#allocation8 + $0x48] sm:$0xff] %v505
      %538 = vst [vmem:[#allocation8 + $0x50] sm:$0xff] %v506
      %539 = vst [vmem:[#allocation8 + $0x58] sm:$0xff] %v507
      %540 = vst [vmem:[#allocation8 + $0x60] sm:$0xff] %v508
      %541 = vst [vmem:[#allocation8 + $0x68] sm:$0xff] %v509
      %542 = vst [vmem:[#allocation8 + $0x70] sm:$0xff] %v510
      %543 = vst [vmem:[#allocation8 + $0x78] sm:$0xff] %v511
      %544 = vst [vmem:[#allocation8 + $0x80] sm:$0xff] %v512
      %545 = vst [vmem:[#allocation8 + $0x88] sm:$0xff] %v513
      %546 = vst [vmem:[#allocation8 + $0x90] sm:$0xff] %v514
      %547 = vst [vmem:[#allocation8 + $0x98] sm:$0xff] %v515
      %548 = vst [vmem:[#allocation8 + $0xa0] sm:$0xff] %v516
      %549 = vst [vmem:[#allocation8 + $0xa8] sm:$0xff] %v517
      %550 = vst [vmem:[#allocation8 + $0xb0] sm:$0xff] %v518
      %551 = vst [vmem:[#allocation8 + $0xb8] sm:$0xff] %v519
      %552 = vst [vmem:[#allocation8 + $0xc0] sm:$0xff] %v520
      %553 = vst [vmem:[#allocation8 + $0xc8] sm:$0xff] %v521
      %554 = vst [vmem:[#allocation8 + $0xd0] sm:$0xff] %v522
      %555 = vst [vmem:[#allocation8 + $0xd8] sm:$0xff] %v523
      %556 = vst [vmem:[#allocation8 + $0xe0] sm:$0xff] %v524
      %557 = vst [vmem:[#allocation8 + $0xe8] sm:$0xff] %v525
      %558 = vst [vmem:[#allocation8 + $0xf0] sm:$0xff] %v526
      %559 = vst [vmem:[#allocation8 + $0xf8] sm:$0xff] %v527
    $region25: #{pallas_matmul.1} parent=1 // pred_fallthru
      _
    // Predicated region
    $region26: #{pallas_matmul.1} parent=1 // pred_check
      _
    $region27: #{pallas_matmul.1} parent=1 // pred_check_branch
      %561 = sbr.rel (0) target = $region29
    $region28: #{pallas_matmul.1} parent=1 // pred_region
      %s563 = ssub.s32 4096, 4096
      %564 = vsyncadd [#allocation5], %s563
      %s565 = sshll.u32 [#allocation8], 4
      %s566 = int_to_ptr.vmem [resolvable:$true] %s565
      %571 = dma.vmem_to_hbm [thread:$0]  %s566, 4096, %s2, [#allocation5], 128, 128, 8
    $region29: #{pallas_matmul.1} parent=1 // pred_fallthru
      _
    // Predicated region
    $region30: #{pallas_matmul.1} parent=1 // pred_check
      _
    $region31: #{pallas_matmul.1} parent=1 // pred_check_branch
      %573 = sbr.rel (0) target = $region33
    $region32: #{pallas_matmul.1} parent=1 // pred_region
      %574 = dma.done [#allocation5], 4096
    $region33: #{pallas_matmul.1} parent=1 // pred_fallthru
      _
    %575 = vsyncpa [#allocation4], 1
    %576 = vsyncpa [#allocation7], 1
    %577 = vsyncpa [#allocation5], 1

</llo_original>
